<compile_context>
chip_gen: v7x
topology: tpu7x:2x2x1
jax: 0.10.0
libtpu: 0.0.40
codegen_flags: <defaults>
</compile_context>

<pallas_src>
import functools

import jax
import jax.numpy as jnp
from jax.experimental import pallas as pl
from jax.experimental.pallas import tpu as pltpu


def _ln2d_kernel(x_ref, w_ref, b_ref, o_ref, *, eps, low_precision):
    # x_ref: (Bn, C, T) block; w_ref / b_ref: (1, C, 1); reduce over axis=1 (C).
    # Each lane column is independent -> masked ragged-edge blocks are safe.
    x = x_ref[...]
    xf = x.astype(jnp.float32)
    if low_precision:
        # Single-pass stats in f32 (no full-size f32 `d` temporary), then
        # normalize + affine in the (bf16) input dtype.
        u = jnp.mean(xf, axis=1, keepdims=True)                 # (Bn, 1, T)
        ex2 = jnp.mean(xf * xf, axis=1, keepdims=True)          # (Bn, 1, T)
        var = jnp.maximum(ex2 - u * u, 0.0)
        inv = jax.lax.rsqrt(var + eps)
        cdt = x.dtype
        y = (x - u.astype(cdt)) * inv.astype(cdt)
        o_ref[...] = (w_ref[...].astype(cdt) * y
                      + b_ref[...].astype(cdt)).astype(o_ref.dtype)
    else:
        # Exact two-pass biased variance (matches PyTorch LayerNorm2d).
        u = jnp.mean(xf, axis=1, keepdims=True)                 # (Bn, 1, T)
        d = xf - u
        var = jnp.mean(d * d, axis=1, keepdims=True)
        y = d * jax.lax.rsqrt(var + eps)
        w = w_ref[...].astype(jnp.float32)
        b = b_ref[...].astype(jnp.float32)
        o_ref[...] = (w * y + b).astype(o_ref.dtype)


def _chip_defaults():
    """Per-generation VMEM limit, per-step block budget, bf16-VALU support."""
    kind = ""
    try:
        kind = jax.devices()[0].device_kind.lower()
    except Exception:
        pass
    vmem_cap = None
    try:
        vmem_cap = pltpu.get_tpu_info().vmem_capacity_bytes
    except Exception:
        vmem_cap = None
    if vmem_cap is None:
        vmem_cap = (64 << 20) if "v7" in kind else (128 << 20)
    # Leave headroom under physical VMEM: v7x (64 MiB) -> 48 MiB limit,
    # v5e/v6e (128 MiB) -> 64 MiB limit.
    vmem_limit = min((vmem_cap * 3) // 4, 64 << 20)
    # Per-grid-step footprint budget (includes double buffers *and* f32
    # temporaries); ~40% headroom for compiler scratch / semaphores.
    block_budget = (vmem_limit * 3) // 5
    # bf16 VALU exists on v6e and later; keep f32 math on older chips.
    low_precision_ok = not any(t in kind for t in ("v2", "v3", "v4", "v5"))
    return int(vmem_limit), int(block_budget), low_precision_ok


def _pick_tiles(N, C, HW, itemsize, block_budget):
    """Choose (Bn, T): batch-images per step and lane tile.

    Per-step VMEM footprint model per element:
      2x double-buffered input + 2x double-buffered output  = 4 * itemsize
      ~3 f32-sized compute temporaries                       = 12 bytes
    """
    per_elem = 4 * itemsize + 12
    per_group = C * 128 * per_elem           # one 128-lane group of one image
    groups = pl.cdiv(HW, 128)
    k_budget = max(1, block_budget // per_group)
    if k_budget >= groups:
        # Whole spatial extent of an image fits in one step; block several
        # images together so tiny feature maps still get multi-MiB DMAs.
        per_image = C * HW * per_elem
        bn = int(max(1, min(N, block_budget // max(per_image, 1))))
        return bn, HW
    # Large spatial extent: one image per step, biggest multiple-of-128 lane
    # tile that fits the budget.  No divisibility requirement: the single
    # ragged edge block (if any) is masked by Pallas.
    return 1, 128 * int(k_budget)


def layer_norm_2d(x, weight, bias, eps=1e-6, *, block_budget_bytes=None):
    """x: (N, C, H, W) NCHW. weight/bias: (C,). Returns (N, C, H, W)."""
    N, C, H, W = x.shape
    HW = H * W
    x3 = x.reshape(N, C, HW)

    vmem_limit, default_budget, lp_ok = _chip_defaults()
    budget = default_budget if block_budget_bytes is None else int(block_budget_bytes)
    itemsize = jnp.dtype(x.dtype).itemsize
    Bn, T = _pick_tiles(N, C, HW, itemsize, budget)
    low_precision = bool(lp_ok and x.dtype == jnp.bfloat16)

    w3 = weight.reshape(1, C, 1)
    b3 = bias.reshape(1, C, 1)

    grid = (pl.cdiv(N, Bn), pl.cdiv(HW, T))

    out3 = pl.pallas_call(
        functools.partial(_ln2d_kernel, eps=eps, low_precision=low_precision),
        out_shape=jax.ShapeDtypeStruct((N, C, HW), x.dtype),
        grid_spec=pltpu.PrefetchScalarGridSpec(
            num_scalar_prefetch=0,
            grid=grid,
            in_specs=[
                # block_shape last two dims: C == full dim, T is a multiple of
                # 128 or == HW, so the (8, 128) constraint is satisfied.
                pl.BlockSpec((Bn, C, T), lambda n, t: (n, 0, t)),
                pl.BlockSpec((1, C, 1), lambda n, t: (0, 0, 0)),
                pl.BlockSpec((1, C, 1), lambda n, t: (0, 0, 0)),
            ],
            out_specs=pl.BlockSpec((Bn, C, T), lambda n, t: (n, 0, t)),
        ),
        compiler_params=pltpu.CompilerParams(
            dimension_semantics=("parallel", "parallel"),
            vmem_limit_bytes=vmem_limit,
        ),
    )(x3, w3, b3)

    return out3.reshape(N, C, H, W)


def _ref_layer_norm_2d(x, weight, bias, eps):
    u = jnp.mean(x, axis=1, keepdims=True)
    s = jnp.mean((x - u) ** 2, axis=1, keepdims=True)
    y = (x - u) / jnp.sqrt(s + eps)
    return weight[None, :, None, None] * y + bias[None, :, None, None]


if __name__ == "__main__":
    key = jax.random.PRNGKey(0)

    # Main check: small shape consistent with the module (batch=2, channels=4,
    # spatial=16).
    N, C, H, W = 2, 4, 16, 16
    x = jax.random.normal(key, (N, C, H, W), dtype=jnp.float32)
    weight = jnp.ones((C,), dtype=jnp.float32)   # matches torch.ones(C)
    bias = jnp.zeros((C,), dtype=jnp.float32)    # matches torch.zeros(C)

    out = jax.block_until_ready(layer_norm_2d(x, weight, bias, eps=1e-6))
    ref = _ref_layer_norm_2d(x, weight, bias, 1e-6)
    assert jnp.allclose(out, ref, atol=1e-5, rtol=1e-5)

    # Small non-multiple-of-128 spatial extent (HW = 14*14 = 196): exercises
    # the batched-images-per-step path with a full-HW lane tile.
    x2 = jax.random.normal(jax.random.PRNGKey(1), (2, 8, 14, 14), dtype=jnp.float32)
    w8 = jnp.ones((8,), dtype=jnp.float32)
    b8 = jnp.zeros((8,), dtype=jnp.float32)
    out2 = jax.block_until_ready(layer_norm_2d(x2, w8, b8, eps=1e-6))
    ref2 = _ref_layer_norm_2d(x2, w8, b8, 1e-6)
    assert jnp.allclose(out2, ref2, atol=1e-5, rtol=1e-5)

    # Force a small block budget so HW (23*29 = 667) is split into multiple
    # lane tiles with a masked ragged edge block (the pad-free path).
    x3 = jax.random.normal(jax.random.PRNGKey(2), (1, 4, 23, 29), dtype=jnp.float32)
    w4 = jnp.ones((4,), dtype=jnp.float32)
    b4 = jnp.zeros((4,), dtype=jnp.float32)
    out3 = jax.block_until_ready(
        layer_norm_2d(x3, w4, b4, eps=1e-6, block_budget_bytes=64 * 1024))
    ref3 = _ref_layer_norm_2d(x3, w4, b4, 1e-6)
    assert jnp.allclose(out3, ref3, atol=1e-5, rtol=1e-5)

    print("KERNEL_OK")
</pallas_src>

<mosaic_0001>
module attributes {stable_mosaic.version = 11 : i64} {
  func.func @_ln2d_kernel(%arg0: i32, %arg1: i32, %arg2: memref<2x4x256xf32, #tpu.memory_space<vmem>>, %arg3: memref<1x4x1xf32, #tpu.memory_space<vmem>>, %arg4: memref<1x4x1xf32, #tpu.memory_space<vmem>>, %arg5: memref<2x4x256xf32, #tpu.memory_space<vmem>>) attributes {dimension_semantics = [#tpu.dimension_semantics<parallel>, #tpu.dimension_semantics<parallel>], iteration_bounds = array<i64: 1, 1>, scalar_prefetch = 0 : i64, scratch_operands = 0 : i64, tpu.core_type = #tpu.core_type<tc>, window_params = [{transform_indices = @transform_0, window_bounds = array<i64: 2, 4, 256>}, {pipeline_mode = #tpu.pipeline_mode<synchronous>, transform_indices = @transform_1, window_bounds = array<i64: 1, 4, 1>}, {pipeline_mode = #tpu.pipeline_mode<synchronous>, transform_indices = @transform_2, window_bounds = array<i64: 1, 4, 1>}, {transform_indices = @transform_3, window_bounds = array<i64: 2, 4, 256>}]} {
    %c0 = arith.constant 0 : index
    %c0_0 = arith.constant 0 : index
    %c0_1 = arith.constant 0 : index
    %0 = vector.load %arg2[%c0, %c0_0, %c0_1] : memref<2x4x256xf32, #tpu.memory_space<vmem>>, vector<2x4x256xf32>
    %cst = arith.constant dense<0.000000e+00> : vector<2x256xf32>
    %1 = vector.multi_reduction <add>, %0, %cst [1] : vector<2x4x256xf32> to vector<2x256xf32>
    %2 = vector.shape_cast %1 : vector<2x256xf32> to vector<2x1x256xf32>
    %cst_2 = arith.constant 4.000000e+00 : f32
    %3 = vector.broadcast %cst_2 : f32 to vector<2x1x256xf32>
    %4 = arith.divf %2, %3 : vector<2x1x256xf32>
    %5 = vector.broadcast %4 : vector<2x1x256xf32> to vector<2x4x256xf32>
    %6 = arith.subf %0, %5 : vector<2x4x256xf32>
    %7 = arith.mulf %6, %6 : vector<2x4x256xf32>
    %cst_3 = arith.constant dense<0.000000e+00> : vector<2x256xf32>
    %8 = vector.multi_reduction <add>, %7, %cst_3 [1] : vector<2x4x256xf32> to vector<2x256xf32>
    %9 = vector.shape_cast %8 : vector<2x256xf32> to vector<2x1x256xf32>
    %cst_4 = arith.constant 4.000000e+00 : f32
    %10 = vector.broadcast %cst_4 : f32 to vector<2x1x256xf32>
    %11 = arith.divf %9, %10 : vector<2x1x256xf32>
    %cst_5 = arith.constant 9.99999997E-7 : f32
    %12 = vector.broadcast %cst_5 : f32 to vector<2x1x256xf32>
    %13 = arith.addf %11, %12 : vector<2x1x256xf32>
    %14 = math.rsqrt %13 : vector<2x1x256xf32>
    %15 = vector.broadcast %14 : vector<2x1x256xf32> to vector<2x4x256xf32>
    %16 = arith.mulf %6, %15 : vector<2x4x256xf32>
    %c0_6 = arith.constant 0 : index
    %c0_7 = arith.constant 0 : index
    %c0_8 = arith.constant 0 : index
    %17 = vector.load %arg3[%c0_6, %c0_7, %c0_8] : memref<1x4x1xf32, #tpu.memory_space<vmem>>, vector<1x4x1xf32>
    %c0_9 = arith.constant 0 : index
    %c0_10 = arith.constant 0 : index
    %c0_11 = arith.constant 0 : index
    %18 = vector.load %arg4[%c0_9, %c0_10, %c0_11] : memref<1x4x1xf32, #tpu.memory_space<vmem>>, vector<1x4x1xf32>
    %19 = vector.broadcast %17 : vector<1x4x1xf32> to vector<2x4x256xf32>
    %20 = arith.mulf %19, %16 : vector<2x4x256xf32>
    %21 = vector.broadcast %18 : vector<1x4x1xf32> to vector<2x4x256xf32>
    %22 = arith.addf %20, %21 : vector<2x4x256xf32>
    %c0_12 = arith.constant 0 : index
    %c0_13 = arith.constant 0 : index
    %c0_14 = arith.constant 0 : index
    %23 = vector.load %arg5[%c0_12, %c0_13, %c0_14] : memref<2x4x256xf32, #tpu.memory_space<vmem>>, vector<2x4x256xf32>
    tpu.vector_store %arg5[%c0_12, %c0_13, %c0_14], %22 {strides = array<i32>} : memref<2x4x256xf32, #tpu.memory_space<vmem>>, vector<2x4x256xf32>,
    return
  }
  func.func @transform_0(%arg0: i32, %arg1: i32) -> (i32, i32, i32) {
    %c0_i32 = arith.constant 0 : i32
    %c0_i32_0 = arith.constant 0 : i32
    return %arg0, %c0_i32, %arg1 : i32, i32, i32
  }
  func.func @transform_1(%arg0: i32, %arg1: i32) -> (i32, i32, i32) {
    %c0_i32 = arith.constant 0 : i32
    %c0_i32_0 = arith.constant 0 : i32
    %c0_i32_1 = arith.constant 0 : i32
    %c0_i32_2 = arith.constant 0 : i32
    return %c0_i32, %c0_i32_0, %c0_i32_1 : i32, i32, i32
  }
  func.func @transform_2(%arg0: i32, %arg1: i32) -> (i32, i32, i32) {
    %c0_i32 = arith.constant 0 : i32
    %c0_i32_0 = arith.constant 0 : i32
    %c0_i32_1 = arith.constant 0 : i32
    %c0_i32_2 = arith.constant 0 : i32
    return %c0_i32, %c0_i32_0, %c0_i32_1 : i32, i32, i32
  }
  func.func @transform_3(%arg0: i32, %arg1: i32) -> (i32, i32, i32) {
    %c0_i32 = arith.constant 0 : i32
    %c0_i32_0 = arith.constant 0 : i32
    return %arg0, %c0_i32, %arg1 : i32, i32, i32
  }
}

</mosaic_0001>

<llo_original>
// kernel: tpu_custom_call.1
$region0: #{tpu_custom_call.1}
  #allocation0 [shape = 'u32[]', space=smem, size = 0x4, offset = 0x4, fixed_abs, tag = 'smem constant byte address 0x4 - core index']
  #allocation1 [shape = 'u32[144,128]{1,0:T(1,128)}', space=vmem, size = 0x12000, scoped, tag = 'internal scratch']
  %s0 = inlined_call_operand.hbm [shape: f32[2,4,256], index: 0, kind: input, shape index: {}]
  %s1 = inlined_call_operand.hbm [shape: f32[1,4,1], index: 1, kind: input, shape index: {}]
  %s2 = inlined_call_operand.hbm [shape: f32[1,4,1], index: 2, kind: input, shape index: {}]
  %s3 = inlined_call_operand.hbm [shape: f32[2,4,256], index: 3, kind: output, shape index: {}]
  %s4 = sld [smem:[#allocation0]]
  $region34: #{tpu_custom_call.1} parent=0
    _
  %s6 = ssub.s32 1, %s4
  %s7 = scalar_select 0, %s6, %s4
  $region1: #{tpu_custom_call.1} parent=0
    #allocation2 [shape = 'u8[8192]{0}', space=vmem, size = 0x2000, scoped, tag = 'input window, operand 0, single buffered']
    #allocation3 [shape = 's32[1]{0}', space=sflag, size = 0x4, scoped, tag = 'scoped memory for tpu_custom_call.1']
    #allocation4 [shape = 's32[1]{0}', space=sflag, size = 0x4, scoped, tag = 'scoped memory for tpu_custom_call.1']
    #allocation5 [shape = 'u8[2048]{0}', space=vmem, size = 0x800, scoped, tag = 'input window, operand 1, single buffered']
    #allocation6 [shape = 's32[1]{0}', space=sflag, size = 0x4, scoped, tag = 'scoped memory for tpu_custom_call.1']
    #allocation7 [shape = 'u8[2048]{0}', space=vmem, size = 0x800, scoped, tag = 'input window, operand 2, single buffered']
    #allocation8 [shape = 'u8[8192]{0}', space=vmem, size = 0x2000, scoped, tag = 'output window, operand 0, single buffered']
    %8 = vsyncpa [#allocation3], 0
    %9 = vsyncpa [#allocation6], 0
    %10 = vsyncpa [#allocation4], 0
    // Predicated region
    $region2: #{tpu_custom_call.1} parent=1 // pred_check
      _
    $region3: #{tpu_custom_call.1} parent=1 // pred_check_branch
      %12 = sbr.rel (0) target = $region5
    $region4: #{tpu_custom_call.1} parent=1 // pred_region
      %s14 = ssub.s32 256, 256
      %15 = vsyncadd [#allocation3], %s14
      %s16 = sshll.u32 [#allocation2], 4
      %s17 = int_to_ptr.vmem [resolvable:$true] %s16
      %22 = dma.hbm_to_vmem [thread:$0]  %s0, 256, %s17, [#allocation3], 128, 128, 8
    $region5: #{tpu_custom_call.1} parent=1 // pred_fallthru
      _
    // Predicated region
    $region6: #{tpu_custom_call.1} parent=1 // pred_check
      _
    $region7: #{tpu_custom_call.1} parent=1 // pred_check_branch
      %24 = sbr.rel (0) target = $region9
    $region8: #{tpu_custom_call.1} parent=1 // pred_region
      %s26 = ssub.s32 64, 64
      %27 = vsyncadd [#allocation6], %s26
      %s29 = sshll.u32 [#allocation5], 4
      %s30 = int_to_ptr.vmem [resolvable:$true] %s29
      %32 = dma.hbm_to_vmem [thread:$0]  %s1, 64, %s30, [#allocation6]
    $region9: #{tpu_custom_call.1} parent=1 // pred_fallthru
      _
    // Predicated region
    $region10: #{tpu_custom_call.1} parent=1 // pred_check
      _
    $region11: #{tpu_custom_call.1} parent=1 // pred_check_branch
      %34 = sbr.rel (0) target = $region13
    $region12: #{tpu_custom_call.1} parent=1 // pred_region
      %s36 = ssub.s32 64, 64
      %37 = vsyncadd [#allocation6], %s36
      %s39 = sshll.u32 [#allocation7], 4
      %s40 = int_to_ptr.vmem [resolvable:$true] %s39
      %42 = dma.hbm_to_vmem [thread:$0]  %s2, 64, %s40, [#allocation6]
    $region13: #{tpu_custom_call.1} parent=1 // pred_fallthru
      _
    // Predicated region
    $region14: #{tpu_custom_call.1} parent=1 // pred_check
      _
    $region15: #{tpu_custom_call.1} parent=1 // pred_check_branch
      %44 = sbr.rel (0) target = $region17
    $region16: #{tpu_custom_call.1} parent=1 // pred_region
      %45 = dma.done [#allocation3], 256
    $region17: #{tpu_custom_call.1} parent=1 // pred_fallthru
      _
    // Predicated region
    $region18: #{tpu_custom_call.1} parent=1 // pred_check
      _
    $region19: #{tpu_custom_call.1} parent=1 // pred_check_branch
      %47 = sbr.rel (0) target = $region21
    $region20: #{tpu_custom_call.1} parent=1 // pred_region
      %48 = dma.done [#allocation6], 64
    $region21: #{tpu_custom_call.1} parent=1 // pred_fallthru
      _
    // Predicated region
    $region22: #{tpu_custom_call.1} parent=1 // pred_check
      _
    $region23: #{tpu_custom_call.1} parent=1 // pred_check_branch
      %50 = sbr.rel (0) target = $region25
    $region24: #{tpu_custom_call.1} parent=1 // pred_region
      %51 = dma.done [#allocation6], 64
    $region25: #{tpu_custom_call.1} parent=1 // pred_fallthru
      _
    %v52 = vld [vmem:[#allocation2] sm:$0xff]
    %v53 = vld [vmem:[#allocation2 + $0x8] sm:$0xff]
    %v56 = vcombine.high %v52, %v52
    %v57 = vcombine.high %v53, %v53
    %vm60 = vcmask 1043456
    %v61 = vsel %vm60, %v52, 0.0
    %v62 = vrot.slane %v61, 4
    %v63 = vadd.f32 %v61, %v62
    %v64 = vrot.slane %v63, 2
    %v65 = vadd.f32 %v63, %v64
    %v66 = vrot.slane %v65, 1
    %v67 = vadd.f32 %v65, %v66
    %v68 = vsel %vm60, %v56, 0.0
    %v69 = vrot.slane %v68, 4
    %v70 = vadd.f32 %v68, %v69
    %v71 = vrot.slane %v70, 2
    %v72 = vadd.f32 %v70, %v71
    %v73 = vrot.slane %v72, 1
    %v74 = vadd.f32 %v72, %v73
    %v75 = vsel %vm60, %v53, 0.0
    %v76 = vrot.slane %v75, 4
    %v77 = vadd.f32 %v75, %v76
    %v78 = vrot.slane %v77, 2
    %v79 = vadd.f32 %v77, %v78
    %v80 = vrot.slane %v79, 1
    %v81 = vadd.f32 %v79, %v80
    %v82 = vsel %vm60, %v57, 0.0
    %v83 = vrot.slane %v82, 4
    %v84 = vadd.f32 %v82, %v83
    %v85 = vrot.slane %v84, 2
    %v86 = vadd.f32 %v84, %v85
    %v87 = vrot.slane %v86, 1
    %v88 = vadd.f32 %v86, %v87
    %v89 = vrcp.pop 4.0
    %v90 = vmul.f32 %v67, %v89
    %v91 = vmul.f32 %v74, %v89
    %v92 = vmul.f32 %v81, %v89
    %v93 = vmul.f32 %v88, %v89
    %v98 = vcombine.low %v90, %v91
    %v99 = vcombine.low %v92, %v93
    %v102 = vsub.f32 %v52, %v98
    %v103 = vsub.f32 %v53, %v99
    %v104 = vmul.f32 %v102, %v102
    %v105 = vmul.f32 %v103, %v103
    %v108 = vcombine.high %v104, %v104
    %v109 = vcombine.high %v105, %v105
    %v112 = vsel %vm60, %v104, 0.0
    %v113 = vrot.slane %v112, 4
    %v114 = vadd.f32 %v112, %v113
    %v115 = vrot.slane %v114, 2
    %v116 = vadd.f32 %v114, %v115
    %v117 = vrot.slane %v116, 1
    %v118 = vadd.f32 %v116, %v117
    %v119 = vsel %vm60, %v108, 0.0
    %v120 = vrot.slane %v119, 4
    %v121 = vadd.f32 %v119, %v120
    %v122 = vrot.slane %v121, 2
    %v123 = vadd.f32 %v121, %v122
    %v124 = vrot.slane %v123, 1
    %v125 = vadd.f32 %v123, %v124
    %v126 = vsel %vm60, %v105, 0.0
    %v127 = vrot.slane %v126, 4
    %v128 = vadd.f32 %v126, %v127
    %v129 = vrot.slane %v128, 2
    %v130 = vadd.f32 %v128, %v129
    %v131 = vrot.slane %v130, 1
    %v132 = vadd.f32 %v130, %v131
    %v133 = vsel %vm60, %v109, 0.0
    %v134 = vrot.slane %v133, 4
    %v135 = vadd.f32 %v133, %v134
    %v136 = vrot.slane %v135, 2
    %v137 = vadd.f32 %v135, %v136
    %v138 = vrot.slane %v137, 1
    %v139 = vadd.f32 %v137, %v138
    %v140 = vmul.f32 %v118, %v89
    %v141 = vmul.f32 %v125, %v89
    %v142 = vmul.f32 %v132, %v89
    %v143 = vmul.f32 %v139, %v89
    %v144 = vadd.f32 %v140, 1e-06
    %v145 = vadd.f32 %v141, 1e-06
    %v146 = vadd.f32 %v142, 1e-06
    %v147 = vadd.f32 %v143, 1e-06
    %v148 = vrsqrt.pop %v144
    %v149 = vrsqrt.pop %v145
    %v150 = vrsqrt.pop %v146
    %v151 = vrsqrt.pop %v147
    %v156 = vcombine.low %v148, %v149
    %v157 = vcombine.low %v150, %v151
    %v160 = vmul.f32 %v102, %v156
    %v161 = vmul.f32 %v103, %v157
    %v162 = vld [vmem:[#allocation5] sm:$0xf]
    %v163 = vld [vmem:[#allocation7] sm:$0xf]
    %165 = vset.pattern.permute.xlu0 0
    %166 = vperm.xlu0 %165, %v162
    %v167 = vpop.permute.xlu0 %166
    %v171 = vcombine.high %v160, %v160
    %v172 = vcombine.high %v161, %v161
    %v175 = vmul.f32 %v167, %v160
    %v176 = vmul.f32 %v167, %v171
    %v177 = vmul.f32 %v167, %v161
    %v178 = vmul.f32 %v167, %v172
    %180 = vset.pattern.permute.xlu0 0
    %181 = vperm.xlu0 %180, %v163
    %v182 = vpop.permute.xlu0 %181
    %v184 = vadd.f32 %v175, %v182
    %v185 = vadd.f32 %v176, %v182
    %v186 = vadd.f32 %v177, %v182
    %v187 = vadd.f32 %v178, %v182
    %v192 = vcombine.low %v184, %v185
    %v193 = vcombine.low %v186, %v187
    %196 = vst [vmem:[#allocation8] sm:$0xff] %v192
    %197 = vst [vmem:[#allocation8 + $0x8] sm:$0xff] %v193
    // Predicated region
    $region26: #{tpu_custom_call.1} parent=1 // pred_check
      _
    $region27: #{tpu_custom_call.1} parent=1 // pred_check_branch
      %199 = sbr.rel (0) target = $region29
    $region28: #{tpu_custom_call.1} parent=1 // pred_region
      %s201 = ssub.s32 256, 256
      %202 = vsyncadd [#allocation4], %s201
      %s203 = sshll.u32 [#allocation8], 4
      %s204 = int_to_ptr.vmem [resolvable:$true] %s203
      %209 = dma.vmem_to_hbm [thread:$0]  %s204, 256, %s3, [#allocation4], 128, 128, 8
    $region29: #{tpu_custom_call.1} parent=1 // pred_fallthru
      _
    // Predicated region
    $region30: #{tpu_custom_call.1} parent=1 // pred_check
      _
    $region31: #{tpu_custom_call.1} parent=1 // pred_check_branch
      %211 = sbr.rel (0) target = $region33
    $region32: #{tpu_custom_call.1} parent=1 // pred_region
      %212 = dma.done [#allocation4], 256
    $region33: #{tpu_custom_call.1} parent=1 // pred_fallthru
      _
    %213 = vsyncpa [#allocation3], 1
    %214 = vsyncpa [#allocation6], 1
    %215 = vsyncpa [#allocation4], 1

</llo_original>
